<compile_context>
chip_gen: v7x
topology: tpu7x:2x2x1
jax: 0.10.0
libtpu: 0.0.40
codegen_flags: <defaults>
</compile_context>

<pallas_src>
import numpy as np
import jax
import jax.numpy as jnp
from jax import lax
from jax.experimental import pallas as pl
from jax.experimental.pallas import tpu as pltpu

# ---- static module configuration (mirrors the PyTorch __init__ semantics) ----
NUM_MOVES = 64            # number of moves in the table (small, synthetic)
NUM_MOVES_PADDED = 128    # K padded to 128 for lane / MXU-depth alignment
EMBEDDING_DIM = 256       # total feature dimension (as documented in module)
NUM_LEARNABLE = 215       # learnable feature count
NUM_NON_LEARNABLE = 41    # non-learnable feature count
DEFAULT_TILE_B = 2048     # batch rows per grid step (mem-bound sweet spot)
CHUNK_M = 256             # M sub-chunk inside the kernel (bounds the one-hot)


def _round_up(x, m):
    return -(-x // m) * m


def gather_kernel(idx_ref, tbl_ref, out_ref):
    """Gather table rows at the given indices via one-hot matmuls on the MXU.

    idx_ref: (chunk, n_chunks) int32 -- column r holds the flat move indices
             for output rows [r*chunk, (r+1)*chunk) of this grid step.
    tbl_ref: (3, NUM_MOVES_PADDED, EMBEDDING_DIM) bfloat16 -- exact hi/mid/lo
             bf16 split of the f32 table (hi+mid+lo == f32 table, bit-exact).
    out_ref: (chunk*n_chunks, EMBEDDING_DIM) out_dtype.
    """
    chunk, n_chunks = idx_ref.shape
    n_splits, kdim, _ = tbl_ref.shape

    # Hoisted out of the chunk loop (JAX does not CSE broadcast_in_dim).
    iota = lax.broadcasted_iota(jnp.int32, (chunk, kdim), 1)

    # Statically unrolled chunk loop (n_chunks <= 8): keeps the one-hot
    # intermediate small (~64 KiB bf16 per chunk) and all slices static.
    for r in range(n_chunks):
        idx_col = idx_ref[:, r:r + 1]                       # (chunk, 1) int32
        # 0.0 / 1.0 are exact in bf16, so the bf16 one-hot loses nothing.
        onehot = (iota == idx_col).astype(jnp.bfloat16)     # (chunk, kdim)
        # Three DEFAULT-precision bf16 dots (hi, mid, lo) with f32 accumulate
        # reconstruct the original f32 table values bit-exactly.
        acc = jnp.dot(onehot, tbl_ref[0], preferred_element_type=jnp.float32)
        for s in range(1, n_splits):
            acc = acc + jnp.dot(onehot, tbl_ref[s],
                                preferred_element_type=jnp.float32)
        out_ref[r * chunk:(r + 1) * chunk, :] = acc.astype(out_ref.dtype)


def _choose_tile(bf, desired):
    """Pick (tile, chunk): rows per grid step and rows per in-kernel chunk.

    * tiny batches: a single step / single chunk (no forced split -- splitting
      a 16-64 row batch just doubles the ~0.35us per-step overhead).
    * large batches: tile is a multiple of CHUNK_M, capped so grid >= 2 and
      both v7x TensorCores get work (harmless on single-TC v5e/v6e)."""
    bf8 = max(8, _round_up(bf, 8))
    if bf8 <= CHUNK_M:
        return bf8, bf8
    desired = max(CHUNK_M, (desired // CHUNK_M) * CHUNK_M)
    bfc = _round_up(bf8, CHUNK_M)
    if bfc <= desired:
        if bfc >= 4 * CHUNK_M:
            # Big enough to matter: split ~evenly into two grid steps.
            return _round_up(bfc // 2, CHUNK_M), CHUNK_M
        return bfc, CHUNK_M
    return desired, CHUNK_M


def move_embedding_forward(move_indices, table_split, *,
                           tile_b=DEFAULT_TILE_B, out_dtype=jnp.float32):
    """Pallas equivalent of MoveEmbeddingLayer.forward.

    move_indices: int array of any shape (values in [0, NUM_MOVES)).
    table_split:  (3, NUM_MOVES_PADDED, EMBEDDING_DIM) bf16 hi/mid/lo split.
    Returns move_indices.shape + (EMBEDDING_DIM,) in `out_dtype` (f32 default,
    matching the PyTorch module; pass jnp.bfloat16 to halve HBM write traffic
    if the downstream consumer accepts it).
    """
    orig_shape = move_indices.shape
    flat = move_indices.reshape(-1).astype(jnp.int32)
    bf = flat.shape[0]
    n_splits, kdim, emb_dim = table_split.shape

    tile, chunk = _choose_tile(bf, tile_b)
    n_chunks = tile // chunk
    grid = pl.cdiv(bf, tile)
    total = grid * tile

    # Only the tiny int32 index array is padded; the output stays exactly
    # (bf, emb_dim) and the ragged last output block is clipped by Pallas,
    # so no extra HBM pass is needed.
    flat_p = jnp.pad(flat, (0, total - bf))

    # Index layout: row-block i (chunk rows) holds the n_chunks index columns
    # for grid step i.  Element (i*chunk + p, r) == flat[i*tile + r*chunk + p].
    # Each step's block is one contiguous ~chunk*n_chunks*4 byte DMA, the VMEM
    # block is ~128 KiB (vs ~1 MiB for a (tile,1) block), and the kernel gets
    # (chunk, 1) columns with static slices -- no in-kernel relayout.
    idx_hbm = (flat_p.reshape(grid, n_chunks, chunk)
                     .transpose(0, 2, 1)
                     .reshape(grid * chunk, n_chunks))

    out = pl.pallas_call(
        gather_kernel,
        out_shape=jax.ShapeDtypeStruct((bf, emb_dim), out_dtype),
        grid_spec=pltpu.PrefetchScalarGridSpec(
            num_scalar_prefetch=0,
            grid=(grid,),
            in_specs=[
                # per-step index slab (dense contiguous DMA)
                pl.BlockSpec((chunk, n_chunks), lambda i: (i, 0)),
                # full hi/mid/lo table; the constant index_map means Pallas
                # fetches this 192 KiB block once and keeps it resident in
                # VMEM across the whole grid (no per-step re-DMA).
                pl.BlockSpec((n_splits, kdim, emb_dim), lambda i: (0, 0, 0)),
            ],
            out_specs=pl.BlockSpec((tile, emb_dim), lambda i: (i, 0)),
        ),
        compiler_params=pltpu.CompilerParams(
            dimension_semantics=("parallel",),
            # Footprint at tile=2048 is ~6 MiB (2x2 MiB output double-buffer,
            # ~0.3 MiB indices, ~0.4 MiB table, small intermediates); 32 MiB
            # leaves headroom for user-tuned larger tiles on every generation.
            vmem_limit_bytes=32 * 1024 * 1024),
    )(idx_hbm, table_split)

    return out.reshape(orig_shape + (emb_dim,))


def _exact_bf16_split(x_f32):
    """Split an f32 array into (hi, mid, lo) bf16 with hi+mid+lo == x exactly."""
    hi = x_f32.astype(jnp.bfloat16)
    r1 = x_f32 - hi.astype(jnp.float32)
    md = r1.astype(jnp.bfloat16)
    r2 = r1 - md.astype(jnp.float32)
    lo = r2.astype(jnp.bfloat16)
    return jnp.stack([hi, md, lo], axis=0)          # (3, M, D) bf16


def build_parameters():
    """Deterministically construct learnable / non-learnable parameters and
    combine them into the full (num_moves_padded, embedding_dim) table, laid
    out column-wise exactly as the PyTorch forward would."""
    rng = np.random.default_rng(0)

    # Interleaved feature ordering (which features are learnable), like the
    # real module where learnable/non-learnable columns are interspersed.
    perm = rng.permutation(EMBEDDING_DIM)
    learnable_indices = np.sort(perm[:NUM_LEARNABLE])
    non_learnable_indices = np.sort(perm[NUM_LEARNABLE:])

    learnable_embeddings = rng.standard_normal(
        (NUM_MOVES, NUM_LEARNABLE)).astype(np.float32)      # nn.Parameter analog
    non_learnable_embeddings = rng.standard_normal(
        (NUM_MOVES, NUM_NON_LEARNABLE)).astype(np.float32)  # registered buffer analog

    full_table = np.zeros((NUM_MOVES_PADDED, EMBEDDING_DIM), dtype=np.float32)
    full_table[:NUM_MOVES, learnable_indices] = learnable_embeddings
    full_table[:NUM_MOVES, non_learnable_indices] = non_learnable_embeddings

    table_split = _exact_bf16_split(jnp.asarray(full_table))
    return (table_split,
            jnp.asarray(learnable_embeddings),
            jnp.asarray(non_learnable_embeddings),
            learnable_indices, non_learnable_indices)


if __name__ == "__main__":
    (table_split, learnable, non_learnable,
     learnable_idx, non_learnable_idx) = build_parameters()

    def reference(move_indices):
        # Pure-JAX reference reproducing the PyTorch forward exactly.
        flat = move_indices.reshape(-1)
        ref = jnp.zeros((flat.shape[0], EMBEDDING_DIM), jnp.float32)
        ref = ref.at[:, learnable_idx].set(learnable[flat])
        ref = ref.at[:, non_learnable_idx].set(non_learnable[flat])
        return ref.reshape(move_indices.shape + (EMBEDDING_DIM,))

    key = jax.random.PRNGKey(0)
    k1, k2, k3 = jax.random.split(key, 3)

    # Primary small demo: move_indices [batch_size, num_moves_per_sample] = [2, 8]
    mi1 = jax.random.randint(k1, (2, 8), 0, NUM_MOVES, dtype=jnp.int32)
    out1 = jax.block_until_ready(move_embedding_forward(mi1, table_split))
    assert out1.shape == mi1.shape + (EMBEDDING_DIM,)
    assert out1.dtype == jnp.float32
    assert jnp.allclose(out1, reference(mi1), atol=1e-6), "mismatch (aligned batch)"

    # Ragged batch (not 8-row aligned) exercises the clipped last output block.
    mi2 = jax.random.randint(k2, (3, 17), 0, NUM_MOVES, dtype=jnp.int32)
    out2 = jax.block_until_ready(move_embedding_forward(mi2, table_split))
    assert out2.shape == mi2.shape + (EMBEDDING_DIM,)
    assert jnp.allclose(out2, reference(mi2), atol=1e-6), "mismatch (ragged batch)"

    # Larger batch exercises the multi-step grid + multi-chunk + ragged path.
    mi3 = jax.random.randint(k3, (16, 100), 0, NUM_MOVES, dtype=jnp.int32)
    out3 = jax.block_until_ready(move_embedding_forward(mi3, table_split))
    assert out3.shape == mi3.shape + (EMBEDDING_DIM,)
    assert jnp.allclose(out3, reference(mi3), atol=1e-6), "mismatch (chunked batch)"

    # TODO(synk): out_dtype=jnp.bfloat16 halves the dominant HBM write traffic
    # if the downstream consumer accepts bf16 embeddings (module spec is f32).
    print("KERNEL_OK")
</pallas_src>

<mosaic_0001>
module attributes {stable_mosaic.version = 11 : i64} {
  func.func @gather_kernel(%arg0: i32, %arg1: memref<16x1xi32, #tpu.memory_space<vmem>>, %arg2: memref<3x128x256xbf16, #tpu.memory_space<vmem>>, %arg3: memref<16x256xf32, #tpu.memory_space<vmem>>) attributes {dimension_semantics = [#tpu.dimension_semantics<parallel>], iteration_bounds = array<i64: 1>, scalar_prefetch = 0 : i64, scratch_operands = 0 : i64, tpu.core_type = #tpu.core_type<tc>, window_params = [{transform_indices = @transform_0, window_bounds = array<i64: 16, 1>}, {pipeline_mode = #tpu.pipeline_mode<synchronous>, transform_indices = @transform_1, window_bounds = array<i64: 3, 128, 256>}, {transform_indices = @transform_2, window_bounds = array<i64: 16, 256>}]} {
    %0 = tpu.iota {dimensions = array<i32: 1>} : vector<16x128xi32>
    %c0 = arith.constant 0 : index
    %c0_0 = arith.constant 0 : index
    %1 = vector.load %arg1[%c0, %c0_0] : memref<16x1xi32, #tpu.memory_space<vmem>>, vector<16x1xi32>
    %2 = vector.broadcast %1 : vector<16x1xi32> to vector<16x128xi32>
    %3 = arith.cmpi eq, %0, %2 : vector<16x128xi32>
    %4 = arith.extui %3 : vector<16x128xi1> to vector<16x128xi32>
    %5 = arith.sitofp %4 : vector<16x128xi32> to vector<16x128xf32>
    %6 = arith.truncf %5 : vector<16x128xf32> to vector<16x128xbf16>
    %c0_1 = arith.constant 0 : index
    %c0_2 = arith.constant 0 : index
    %c0_3 = arith.constant 0 : index
    %7 = vector.load %arg2[%c0_1, %c0_2, %c0_3] : memref<3x128x256xbf16, #tpu.memory_space<vmem>>, vector<1x128x256xbf16>
    %8 = vector.shape_cast %7 : vector<1x128x256xbf16> to vector<128x256xbf16>
    %cst = arith.constant dense<0.000000e+00> : vector<16x256xf32>
    %9 = tpu.matmul %6, %8, %cst {dimension_numbers = #tpu.dot_dimension_numbers<[1], [0], [0], [1], [0, 0, 1, 1], [], []>} : vector<16x128xbf16>, vector<128x256xbf16>, vector<16x256xf32> -> vector<16x256xf32>
    %c1 = arith.constant 1 : index
    %c0_4 = arith.constant 0 : index
    %c0_5 = arith.constant 0 : index
    %10 = vector.load %arg2[%c1, %c0_4, %c0_5] : memref<3x128x256xbf16, #tpu.memory_space<vmem>>, vector<1x128x256xbf16>
    %11 = vector.shape_cast %10 : vector<1x128x256xbf16> to vector<128x256xbf16>
    %cst_6 = arith.constant dense<0.000000e+00> : vector<16x256xf32>
    %12 = tpu.matmul %6, %11, %cst_6 {dimension_numbers = #tpu.dot_dimension_numbers<[1], [0], [0], [1], [0, 0, 1, 1], [], []>} : vector<16x128xbf16>, vector<128x256xbf16>, vector<16x256xf32> -> vector<16x256xf32>
    %13 = arith.addf %9, %12 : vector<16x256xf32>
    %c2 = arith.constant 2 : index
    %c0_7 = arith.constant 0 : index
    %c0_8 = arith.constant 0 : index
    %14 = vector.load %arg2[%c2, %c0_7, %c0_8] : memref<3x128x256xbf16, #tpu.memory_space<vmem>>, vector<1x128x256xbf16>
    %15 = vector.shape_cast %14 : vector<1x128x256xbf16> to vector<128x256xbf16>
    %cst_9 = arith.constant dense<0.000000e+00> : vector<16x256xf32>
    %16 = tpu.matmul %6, %15, %cst_9 {dimension_numbers = #tpu.dot_dimension_numbers<[1], [0], [0], [1], [0, 0, 1, 1], [], []>} : vector<16x128xbf16>, vector<128x256xbf16>, vector<16x256xf32> -> vector<16x256xf32>
    %17 = arith.addf %13, %16 : vector<16x256xf32>
    %c0_10 = arith.constant 0 : index
    %c0_11 = arith.constant 0 : index
    %18 = vector.load %arg3[%c0_10, %c0_11] : memref<16x256xf32, #tpu.memory_space<vmem>>, vector<16x256xf32>
    tpu.vector_store %arg3[%c0_10, %c0_11], %17 {strides = array<i32>} : memref<16x256xf32, #tpu.memory_space<vmem>>, vector<16x256xf32>,
    return
  }
  func.func @transform_0(%arg0: i32) -> (i32, i32) {
    %c0_i32 = arith.constant 0 : i32
    %c0_i32_0 = arith.constant 0 : i32
    return %arg0, %c0_i32 : i32, i32
  }
  func.func @transform_1(%arg0: i32) -> (i32, i32, i32) {
    %c0_i32 = arith.constant 0 : i32
    %c0_i32_0 = arith.constant 0 : i32
    %c0_i32_1 = arith.constant 0 : i32
    %c0_i32_2 = arith.constant 0 : i32
    return %c0_i32, %c0_i32_0, %c0_i32_1 : i32, i32, i32
  }
  func.func @transform_2(%arg0: i32) -> (i32, i32) {
    %c0_i32 = arith.constant 0 : i32
    %c0_i32_0 = arith.constant 0 : i32
    return %arg0, %c0_i32 : i32, i32
  }
}

</mosaic_0001>

<llo_original>
// kernel: tpu_custom_call.1
$region0: #{tpu_custom_call.1}
  #allocation0 [shape = 'u32[]', space=smem, size = 0x4, offset = 0x4, fixed_abs, tag = 'smem constant byte address 0x4 - core index']
  #allocation1 [shape = 'u32[144,128]{1,0:T(1,128)}', space=vmem, size = 0x12000, scoped, tag = 'internal scratch']
  %s0 = inlined_call_operand.vmem [shape: s32[16,1], index: 0, kind: input, shape index: {}]
  %s1 = inlined_call_operand.hbm [shape: bf16[3,128,256], index: 1, kind: input, shape index: {}]
  %s2 = inlined_call_operand.hbm [shape: f32[16,256], index: 2, kind: output, shape index: {}]
  %s3 = sld [smem:[#allocation0]]
  $region22: #{tpu_custom_call.1} parent=0
    _
  %s5 = ssub.s32 1, %s3
  %s6 = scalar_select 0, %s5, %s3
  $region1: #{tpu_custom_call.1} parent=0
    #allocation2 [shape = 'u8[196608]{0}', space=vmem, size = 0x30000, scoped, tag = 'input window, operand 1, single buffered']
    #allocation3 [shape = 's32[1]{0}', space=sflag, size = 0x4, scoped, tag = 'scoped memory for tpu_custom_call.1']
    #allocation4 [shape = 's32[1]{0}', space=sflag, size = 0x4, scoped, tag = 'scoped memory for tpu_custom_call.1']
    #allocation5 [shape = 'u8[16384]{0}', space=vmem, size = 0x4000, scoped, tag = 'output window, operand 0, single buffered']
    %7 = vsyncpa [#allocation3], 0
    %8 = vsyncpa [#allocation4], 0
    // Predicated region
    $region2: #{tpu_custom_call.1} parent=1 // pred_check
      _
    $region3: #{tpu_custom_call.1} parent=1 // pred_check_branch
      %10 = sbr.rel (0) target = $region5
    $region4: #{tpu_custom_call.1} parent=1 // pred_region
      _
    $region5: #{tpu_custom_call.1} parent=1 // pred_fallthru
      _
    // Predicated region
    $region6: #{tpu_custom_call.1} parent=1 // pred_check
      _
    $region7: #{tpu_custom_call.1} parent=1 // pred_check_branch
      %12 = sbr.rel (0) target = $region9
    $region8: #{tpu_custom_call.1} parent=1 // pred_region
      %s14 = ssub.s32 6144, 6144
      %15 = vsyncadd [#allocation3], %s14
      %s16 = sshll.u32 [#allocation2], 4
      %s17 = int_to_ptr.vmem [resolvable:$true] %s16
      %22 = dma.hbm_to_vmem [thread:$0]  %s1, 6144, %s17, [#allocation3], 128, 128, 8
    $region9: #{tpu_custom_call.1} parent=1 // pred_fallthru
      _
    // Predicated region
    $region10: #{tpu_custom_call.1} parent=1 // pred_check
      _
    $region11: #{tpu_custom_call.1} parent=1 // pred_check_branch
      %24 = sbr.rel (0) target = $region13
    $region12: #{tpu_custom_call.1} parent=1 // pred_region
      %25 = dma.done [#allocation3], 6144
    $region13: #{tpu_custom_call.1} parent=1 // pred_fallthru
      _
    %v27 = vlaneseq
    %v28 = vand.u32 %v27, 127
    %v29 = vld [vmem:[%s0] sm:$0xff]
    %v30 = vld [vmem:[%s0 + $0x8] sm:$0xff]
    %31 = vset.pattern.permute.xlu0 0
    %32 = vperm.xlu0 %31, %v29
    %v33 = vpop.permute.xlu0 %32
    %34 = vset.pattern.permute.xlu0 0
    %35 = vperm.xlu0 %34, %v30
    %v36 = vpop.permute.xlu0 %35
    %vm37 = vcmp.eq.s32.totalorder %v28, %v33
    %vm38 = vcmp.eq.s32.totalorder %v28, %v36
    %v39 = vsel %vm37, 1, 0
    %v40 = vsel %vm38, 1, 0
    %v41 = vcvt.s32.f32 %v39
    %v42 = vcvt.s32.f32 %v40
    %v43 = vpack.c.bf16 %v42, %v41
    %v44 = vld [vmem:[#allocation2] sm:$0xff]
    %v45 = vld [vmem:[#allocation2 + $0x8] sm:$0xff]
    %v46 = vld [vmem:[#allocation2 + $0x10] sm:$0xff]
    %v47 = vld [vmem:[#allocation2 + $0x18] sm:$0xff]
    %v48 = vld [vmem:[#allocation2 + $0x20] sm:$0xff]
    %v49 = vld [vmem:[#allocation2 + $0x28] sm:$0xff]
    %v50 = vld [vmem:[#allocation2 + $0x30] sm:$0xff]
    %v51 = vld [vmem:[#allocation2 + $0x38] sm:$0xff]
    %v52 = vld [vmem:[#allocation2 + $0x40] sm:$0xff]
    %v53 = vld [vmem:[#allocation2 + $0x48] sm:$0xff]
    %v54 = vld [vmem:[#allocation2 + $0x50] sm:$0xff]
    %v55 = vld [vmem:[#allocation2 + $0x58] sm:$0xff]
    %v56 = vld [vmem:[#allocation2 + $0x60] sm:$0xff]
    %v57 = vld [vmem:[#allocation2 + $0x68] sm:$0xff]
    %v58 = vld [vmem:[#allocation2 + $0x70] sm:$0xff]
    %v59 = vld [vmem:[#allocation2 + $0x78] sm:$0xff]
    %s60 = scalar_lea.vmem [#allocation2], 128
    %v61 = vld [vmem:[%s60] sm:$0xff]
    %v62 = vld [vmem:[%s60 + $0x8] sm:$0xff]
    %v63 = vld [vmem:[%s60 + $0x10] sm:$0xff]
    %v64 = vld [vmem:[%s60 + $0x18] sm:$0xff]
    %v65 = vld [vmem:[%s60 + $0x20] sm:$0xff]
    %v66 = vld [vmem:[%s60 + $0x28] sm:$0xff]
    %v67 = vld [vmem:[%s60 + $0x30] sm:$0xff]
    %v68 = vld [vmem:[%s60 + $0x38] sm:$0xff]
    %v69 = vld [vmem:[%s60 + $0x40] sm:$0xff]
    %v70 = vld [vmem:[%s60 + $0x48] sm:$0xff]
    %v71 = vld [vmem:[%s60 + $0x50] sm:$0xff]
    %v72 = vld [vmem:[%s60 + $0x58] sm:$0xff]
    %v73 = vld [vmem:[%s60 + $0x60] sm:$0xff]
    %v74 = vld [vmem:[%s60 + $0x68] sm:$0xff]
    %v75 = vld [vmem:[%s60 + $0x70] sm:$0xff]
    %v76 = vld [vmem:[%s60 + $0x78] sm:$0xff]
    %v93 = vunpack.c.l.b16 %v61
    %v94 = vunpack.c.h.b16 %v61
    %v95 = vunpack.c.l.b16 %v62
    %v96 = vunpack.c.h.b16 %v62
    %v97 = vunpack.c.l.b16 %v63
    %v98 = vunpack.c.h.b16 %v63
    %v99 = vunpack.c.l.b16 %v64
    %v100 = vunpack.c.h.b16 %v64
    %v101 = vunpack.c.l.b16 %v65
    %v102 = vunpack.c.h.b16 %v65
    %v103 = vunpack.c.l.b16 %v66
    %v104 = vunpack.c.h.b16 %v66
    %v105 = vunpack.c.l.b16 %v67
    %v106 = vunpack.c.h.b16 %v67
    %v107 = vunpack.c.l.b16 %v68
    %v108 = vunpack.c.h.b16 %v68
    %v109 = vunpack.c.l.b16 %v69
    %v110 = vunpack.c.h.b16 %v69
    %v111 = vunpack.c.l.b16 %v70
    %v112 = vunpack.c.h.b16 %v70
    %v113 = vunpack.c.l.b16 %v71
    %v114 = vunpack.c.h.b16 %v71
    %v115 = vunpack.c.l.b16 %v72
    %v116 = vunpack.c.h.b16 %v72
    %v117 = vunpack.c.l.b16 %v73
    %v118 = vunpack.c.h.b16 %v73
    %v119 = vunpack.c.l.b16 %v74
    %v120 = vunpack.c.h.b16 %v74
    %v121 = vunpack.c.l.b16 %v75
    %v122 = vunpack.c.h.b16 %v75
    %v123 = vunpack.c.l.b16 %v76
    %v124 = vunpack.c.h.b16 %v76
    %v125 = vpack.c.b16 %v95, %v93
    %v126 = vpack.c.b16 %v96, %v94
    %v127 = vpack.c.b16 %v99, %v97
    %v128 = vpack.c.b16 %v100, %v98
    %v129 = vpack.c.b16 %v103, %v101
    %v130 = vpack.c.b16 %v104, %v102
    %v131 = vpack.c.b16 %v107, %v105
    %v132 = vpack.c.b16 %v108, %v106
    %v133 = vpack.c.b16 %v111, %v109
    %v134 = vpack.c.b16 %v112, %v110
    %v135 = vpack.c.b16 %v115, %v113
    %v136 = vpack.c.b16 %v116, %v114
    %v137 = vpack.c.b16 %v119, %v117
    %v138 = vpack.c.b16 %v120, %v118
    %v139 = vpack.c.b16 %v123, %v121
    %v140 = vpack.c.b16 %v124, %v122
    %157 = vmatprep.subr.bf16.mxu0 %v126
    %158 = vmatpush1.bf16.msra.mxu0 %v125
    %159 = vmatprep.subr.bf16.mxu0 %v128
    %160 = vmatpush1.bf16.msra.mxu0 %v127
    %161 = vmatprep.subr.bf16.mxu0 %v130
    %162 = vmatpush1.bf16.msra.mxu0 %v129
    %163 = vmatprep.subr.bf16.mxu0 %v132
    %164 = vmatpush1.bf16.msra.mxu0 %v131
    %165 = vmatprep.subr.bf16.mxu0 %v134
    %166 = vmatpush1.bf16.msra.mxu0 %v133
    %167 = vmatprep.subr.bf16.mxu0 %v136
    %168 = vmatpush1.bf16.msra.mxu0 %v135
    %169 = vmatprep.subr.bf16.mxu0 %v138
    %170 = vmatpush1.bf16.msra.mxu0 %v137
    %171 = vmatprep.subr.bf16.mxu0 %v140
    %172 = vmatpush1.bf16.msra.mxu0 %v139
    %173 = vmatprep.subr.bf16.mxu0 0
    %174 = vmatpush1.bf16.msra.mxu0 0
    %175 = vmatprep.subr.bf16.mxu0 0
    %176 = vmatpush1.bf16.msra.mxu0 0
    %177 = vmatprep.subr.bf16.mxu0 0
    %178 = vmatpush1.bf16.msra.mxu0 0
    %179 = vmatprep.subr.bf16.mxu0 0
    %180 = vmatpush1.bf16.msra.mxu0 0
    %181 = vmatprep.subr.bf16.mxu0 0
    %182 = vmatpush1.bf16.msra.mxu0 0
    %183 = vmatprep.subr.bf16.mxu0 0
    %184 = vmatpush1.bf16.msra.mxu0 0
    %185 = vmatprep.subr.bf16.mxu0 0
    %186 = vmatpush1.bf16.msra.mxu0 0
    %187 = vmatprep.subr.bf16.mxu0 0
    %188 = vmatpush1.bf16.msra.mxu0 0
    %189 = vmatprep.mubr.bf16.mxu0 0
    %190 = vmatmul.mubr.bf16.gmra.mrb[0].mxu0 %v43
    %v191 = vpop.f32.mrb[0].mxu0
    %v192 = vadd.f32 0.0, %v191
    %v193 = vpop.f32.mrb[0].mxu0
    %v194 = vadd.f32 0.0, %v193
    %v195 = vpop.f32.mrb[0].mxu0
    %v196 = vadd.f32 0.0, %v195
    %v197 = vpop.f32.mrb[0].mxu0
    %v198 = vadd.f32 0.0, %v197
    %199 = vdwg.mxu0
    %v216 = vunpack.c.l.b16 %v44
    %v217 = vunpack.c.h.b16 %v44
    %v218 = vunpack.c.l.b16 %v45
    %v219 = vunpack.c.h.b16 %v45
    %v220 = vunpack.c.l.b16 %v46
    %v221 = vunpack.c.h.b16 %v46
    %v222 = vunpack.c.l.b16 %v47
    %v223 = vunpack.c.h.b16 %v47
    %v224 = vunpack.c.l.b16 %v48
    %v225 = vunpack.c.h.b16 %v48
    %v226 = vunpack.c.l.b16 %v49
    %v227 = vunpack.c.h.b16 %v49
    %v228 = vunpack.c.l.b16 %v50
    %v229 = vunpack.c.h.b16 %v50
    %v230 = vunpack.c.l.b16 %v51
    %v231 = vunpack.c.h.b16 %v51
    %v232 = vunpack.c.l.b16 %v52
    %v233 = vunpack.c.h.b16 %v52
    %v234 = vunpack.c.l.b16 %v53
    %v235 = vunpack.c.h.b16 %v53
    %v236 = vunpack.c.l.b16 %v54
    %v237 = vunpack.c.h.b16 %v54
    %v238 = vunpack.c.l.b16 %v55
    %v239 = vunpack.c.h.b16 %v55
    %v240 = vunpack.c.l.b16 %v56
    %v241 = vunpack.c.h.b16 %v56
    %v242 = vunpack.c.l.b16 %v57
    %v243 = vunpack.c.h.b16 %v57
    %v244 = vunpack.c.l.b16 %v58
    %v245 = vunpack.c.h.b16 %v58
    %v246 = vunpack.c.l.b16 %v59
    %v247 = vunpack.c.h.b16 %v59
    %v248 = vpack.c.b16 %v218, %v216
    %v249 = vpack.c.b16 %v219, %v217
    %v250 = vpack.c.b16 %v222, %v220
    %v251 = vpack.c.b16 %v223, %v221
    %v252 = vpack.c.b16 %v226, %v224
    %v253 = vpack.c.b16 %v227, %v225
    %v254 = vpack.c.b16 %v230, %v228
    %v255 = vpack.c.b16 %v231, %v229
    %v256 = vpack.c.b16 %v234, %v232
    %v257 = vpack.c.b16 %v235, %v233
    %v258 = vpack.c.b16 %v238, %v236
    %v259 = vpack.c.b16 %v239, %v237
    %v260 = vpack.c.b16 %v242, %v240
    %v261 = vpack.c.b16 %v243, %v241
    %v262 = vpack.c.b16 %v246, %v244
    %v263 = vpack.c.b16 %v247, %v245
    %280 = vmatprep.subr.bf16.mxu0 %v249
    %281 = vmatpush1.bf16.msra.mxu0 %v248
    %282 = vmatprep.subr.bf16.mxu0 %v251
    %283 = vmatpush1.bf16.msra.mxu0 %v250
    %284 = vmatprep.subr.bf16.mxu0 %v253
    %285 = vmatpush1.bf16.msra.mxu0 %v252
    %286 = vmatprep.subr.bf16.mxu0 %v255
    %287 = vmatpush1.bf16.msra.mxu0 %v254
    %288 = vmatprep.subr.bf16.mxu0 %v257
    %289 = vmatpush1.bf16.msra.mxu0 %v256
    %290 = vmatprep.subr.bf16.mxu0 %v259
    %291 = vmatpush1.bf16.msra.mxu0 %v258
    %292 = vmatprep.subr.bf16.mxu0 %v261
    %293 = vmatpush1.bf16.msra.mxu0 %v260
    %294 = vmatprep.subr.bf16.mxu0 %v263
    %295 = vmatpush1.bf16.msra.mxu0 %v262
    %296 = vmatprep.subr.bf16.mxu0 0
    %297 = vmatpush1.bf16.msra.mxu0 0
    %298 = vmatprep.subr.bf16.mxu0 0
    %299 = vmatpush1.bf16.msra.mxu0 0
    %300 = vmatprep.subr.bf16.mxu0 0
    %301 = vmatpush1.bf16.msra.mxu0 0
    %302 = vmatprep.subr.bf16.mxu0 0
    %303 = vmatpush1.bf16.msra.mxu0 0
    %304 = vmatprep.subr.bf16.mxu0 0
    %305 = vmatpush1.bf16.msra.mxu0 0
    %306 = vmatprep.subr.bf16.mxu0 0
    %307 = vmatpush1.bf16.msra.mxu0 0
    %308 = vmatprep.subr.bf16.mxu0 0
    %309 = vmatpush1.bf16.msra.mxu0 0
    %310 = vmatprep.subr.bf16.mxu0 0
    %311 = vmatpush1.bf16.msra.mxu0 0
    %312 = vmatprep.mubr.bf16.mxu0 0
    %313 = vmatmul.mubr.bf16.gmra.mrb[0].mxu0 %v43
    %v314 = vpop.f32.mrb[0].mxu0
    %v315 = vadd.f32 %v192, %v314
    %v316 = vpop.f32.mrb[0].mxu0
    %v317 = vadd.f32 %v194, %v316
    %v318 = vpop.f32.mrb[0].mxu0
    %v319 = vadd.f32 %v196, %v318
    %v320 = vpop.f32.mrb[0].mxu0
    %v321 = vadd.f32 %v198, %v320
    %322 = vdwg.mxu0
    %s323 = scalar_lea.vmem [#allocation2], 256
    %v324 = vld [vmem:[%s323] sm:$0xff]
    %v325 = vld [vmem:[%s323 + $0x8] sm:$0xff]
    %v326 = vld [vmem:[%s323 + $0x10] sm:$0xff]
    %v327 = vld [vmem:[%s323 + $0x18] sm:$0xff]
    %v328 = vld [vmem:[%s323 + $0x20] sm:$0xff]
    %v329 = vld [vmem:[%s323 + $0x28] sm:$0xff]
    %v330 = vld [vmem:[%s323 + $0x30] sm:$0xff]
    %v331 = vld [vmem:[%s323 + $0x38] sm:$0xff]
    %v332 = vld [vmem:[%s323 + $0x40] sm:$0xff]
    %v333 = vld [vmem:[%s323 + $0x48] sm:$0xff]
    %v334 = vld [vmem:[%s323 + $0x50] sm:$0xff]
    %v335 = vld [vmem:[%s323 + $0x58] sm:$0xff]
    %v336 = vld [vmem:[%s323 + $0x60] sm:$0xff]
    %v337 = vld [vmem:[%s323 + $0x68] sm:$0xff]
    %v338 = vld [vmem:[%s323 + $0x70] sm:$0xff]
    %v339 = vld [vmem:[%s323 + $0x78] sm:$0xff]
    %v356 = vunpack.c.l.b16 %v324
    %v357 = vunpack.c.h.b16 %v324
    %v358 = vunpack.c.l.b16 %v325
    %v359 = vunpack.c.h.b16 %v325
    %v360 = vunpack.c.l.b16 %v326
    %v361 = vunpack.c.h.b16 %v326
    %v362 = vunpack.c.l.b16 %v327
    %v363 = vunpack.c.h.b16 %v327
    %v364 = vunpack.c.l.b16 %v328
    %v365 = vunpack.c.h.b16 %v328
    %v366 = vunpack.c.l.b16 %v329
    %v367 = vunpack.c.h.b16 %v329
    %v368 = vunpack.c.l.b16 %v330
    %v369 = vunpack.c.h.b16 %v330
    %v370 = vunpack.c.l.b16 %v331
    %v371 = vunpack.c.h.b16 %v331
    %v372 = vunpack.c.l.b16 %v332
    %v373 = vunpack.c.h.b16 %v332
    %v374 = vunpack.c.l.b16 %v333
    %v375 = vunpack.c.h.b16 %v333
    %v376 = vunpack.c.l.b16 %v334
    %v377 = vunpack.c.h.b16 %v334
    %v378 = vunpack.c.l.b16 %v335
    %v379 = vunpack.c.h.b16 %v335
    %v380 = vunpack.c.l.b16 %v336
    %v381 = vunpack.c.h.b16 %v336
    %v382 = vunpack.c.l.b16 %v337
    %v383 = vunpack.c.h.b16 %v337
    %v384 = vunpack.c.l.b16 %v338
    %v385 = vunpack.c.h.b16 %v338
    %v386 = vunpack.c.l.b16 %v339
    %v387 = vunpack.c.h.b16 %v339
    %v388 = vpack.c.b16 %v358, %v356
    %v389 = vpack.c.b16 %v359, %v357
    %v390 = vpack.c.b16 %v362, %v360
    %v391 = vpack.c.b16 %v363, %v361
    %v392 = vpack.c.b16 %v366, %v364
    %v393 = vpack.c.b16 %v367, %v365
    %v394 = vpack.c.b16 %v370, %v368
    %v395 = vpack.c.b16 %v371, %v369
    %v396 = vpack.c.b16 %v374, %v372
    %v397 = vpack.c.b16 %v375, %v373
    %v398 = vpack.c.b16 %v378, %v376
    %v399 = vpack.c.b16 %v379, %v377
    %v400 = vpack.c.b16 %v382, %v380
    %v401 = vpack.c.b16 %v383, %v381
    %v402 = vpack.c.b16 %v386, %v384
    %v403 = vpack.c.b16 %v387, %v385
    %420 = vmatprep.subr.bf16.mxu0 %v389
    %421 = vmatpush1.bf16.msra.mxu0 %v388
    %422 = vmatprep.subr.bf16.mxu0 %v391
    %423 = vmatpush1.bf16.msra.mxu0 %v390
    %424 = vmatprep.subr.bf16.mxu0 %v393
    %425 = vmatpush1.bf16.msra.mxu0 %v392
    %426 = vmatprep.subr.bf16.mxu0 %v395
    %427 = vmatpush1.bf16.msra.mxu0 %v394
    %428 = vmatprep.subr.bf16.mxu0 %v397
    %429 = vmatpush1.bf16.msra.mxu0 %v396
    %430 = vmatprep.subr.bf16.mxu0 %v399
    %431 = vmatpush1.bf16.msra.mxu0 %v398
    %432 = vmatprep.subr.bf16.mxu0 %v401
    %433 = vmatpush1.bf16.msra.mxu0 %v400
    %434 = vmatprep.subr.bf16.mxu0 %v403
    %435 = vmatpush1.bf16.msra.mxu0 %v402
    %436 = vmatprep.subr.bf16.mxu0 0
    %437 = vmatpush1.bf16.msra.mxu0 0
    %438 = vmatprep.subr.bf16.mxu0 0
    %439 = vmatpush1.bf16.msra.mxu0 0
    %440 = vmatprep.subr.bf16.mxu0 0
    %441 = vmatpush1.bf16.msra.mxu0 0
    %442 = vmatprep.subr.bf16.mxu0 0
    %443 = vmatpush1.bf16.msra.mxu0 0
    %444 = vmatprep.subr.bf16.mxu0 0
    %445 = vmatpush1.bf16.msra.mxu0 0
    %446 = vmatprep.subr.bf16.mxu0 0
    %447 = vmatpush1.bf16.msra.mxu0 0
    %448 = vmatprep.subr.bf16.mxu0 0
    %449 = vmatpush1.bf16.msra.mxu0 0
    %450 = vmatprep.subr.bf16.mxu0 0
    %451 = vmatpush1.bf16.msra.mxu0 0
    %452 = vmatprep.mubr.bf16.mxu0 0
    %453 = vmatmul.mubr.bf16.gmra.mrb[0].mxu0 %v43
    %v454 = vpop.f32.mrb[0].mxu0
    %v455 = vadd.f32 0.0, %v454
    %v456 = vpop.f32.mrb[0].mxu0
    %v457 = vadd.f32 0.0, %v456
    %v458 = vpop.f32.mrb[0].mxu0
    %v459 = vadd.f32 0.0, %v458
    %v460 = vpop.f32.mrb[0].mxu0
    %v461 = vadd.f32 0.0, %v460
    %462 = vdwg.mxu0
    %v463 = vadd.f32 %v315, %v455
    %v464 = vadd.f32 %v317, %v457
    %v465 = vadd.f32 %v319, %v459
    %v466 = vadd.f32 %v321, %v461
    %467 = vst [vmem:[#allocation5] sm:$0xff] %v463
    %468 = vst [vmem:[#allocation5 + $0x8] sm:$0xff] %v464
    %469 = vst [vmem:[#allocation5 + $0x10] sm:$0xff] %v465
    %470 = vst [vmem:[#allocation5 + $0x18] sm:$0xff] %v466
    // Predicated region
    $region14: #{tpu_custom_call.1} parent=1 // pred_check
      _
    $region15: #{tpu_custom_call.1} parent=1 // pred_check_branch
      %472 = sbr.rel (0) target = $region17
    $region16: #{tpu_custom_call.1} parent=1 // pred_region
      %s474 = ssub.s32 512, 512
      %475 = vsyncadd [#allocation4], %s474
      %s476 = sshll.u32 [#allocation5], 4
      %s477 = int_to_ptr.vmem [resolvable:$true] %s476
      %482 = dma.vmem_to_hbm [thread:$0]  %s477, 512, %s2, [#allocation4], 256, 256, 16
    $region17: #{tpu_custom_call.1} parent=1 // pred_fallthru
      _
    // Predicated region
    $region18: #{tpu_custom_call.1} parent=1 // pred_check
      _
    $region19: #{tpu_custom_call.1} parent=1 // pred_check_branch
      %484 = sbr.rel (0) target = $region21
    $region20: #{tpu_custom_call.1} parent=1 // pred_region
      %485 = dma.done [#allocation4], 512
    $region21: #{tpu_custom_call.1} parent=1 // pred_fallthru
      _
    %486 = vsyncpa [#allocation3], 1
    %487 = vsyncpa [#allocation4], 1

</llo_original>
